<compile_context>
chip_gen: v6e
topology: v6e:2x2x1
jax: 0.10.0
libtpu: 0.0.40
codegen_flags: <defaults>
</compile_context>

<pallas_src>
import functools

import jax
import jax.numpy as jnp
from jax.experimental import pallas as pl
from jax.experimental.pallas import tpu as pltpu


def _round_up(x, m):
    return ((x + m - 1) // m) * m


def _pad_axis(a, axis, new_size):
    pad = new_size - a.shape[axis]
    if pad == 0:
        return a
    widths = [(0, 0)] * a.ndim
    widths[axis] = (0, pad)
    return jnp.pad(a, widths)


# ----------------------------------------------------------------------------
# Hardware-aware budgets (queried once).
# ----------------------------------------------------------------------------
@functools.lru_cache(maxsize=None)
def _device_kind():
    try:
        return jax.devices()[0].device_kind.lower()
    except Exception:
        return ""


@functools.lru_cache(maxsize=None)
def _vmem_limit_bytes():
    cap = None
    try:
        info_fn = getattr(pltpu, "get_tpu_info", None)
        if info_fn is not None:
            cap = getattr(info_fn(), "vmem_capacity_bytes", None)
    except Exception:
        cap = None
    if cap is None:
        kind = _device_kind()
        if "v5" in kind or "v6" in kind:
            cap = 128 * 1024 * 1024
        else:
            cap = 64 * 1024 * 1024      # v7x / unknown: be conservative.
    # ~70% of physical VMEM as the scoped limit (leave Mosaic headroom).
    return min(int(cap * 0.70), 96 * 1024 * 1024)


@functools.lru_cache(maxsize=None)
def _is_v7x():
    return "v7" in _device_kind()


# ----------------------------------------------------------------------------
# Tile selection.
# ----------------------------------------------------------------------------
def _choose_column_tiles(Hp, w_itemsize, w_budget, want_min_tiles):
    """Number of per-gate hidden-column tiles.  tn = Hp // n_n must be a
    lane-aligned exact divisor; the (128, tn) double-buffered W block must fit
    the weight budget.  want_min_tiles=2 on v7x shards columns across TCs."""
    max_n = max(1, Hp // 128)
    for n_n in range(1, max_n + 1):
        if n_n < want_min_tiles:
            continue
        if Hp % n_n:
            continue
        tn = Hp // n_n
        if tn % 128:
            continue
        if 2 * 4 * 128 * tn * w_itemsize <= w_budget:
            return n_n
    return max_n                                  # fallback: tn = 128


def _choose_k_tile(Kp, tn, w_itemsize, w_budget):
    """Largest lane-aligned exact divisor of Kp whose double-buffered W tile
    fits the weight budget (fewer grid steps, longer roofline DMAs)."""
    max_nk = max(1, Kp // 128)
    for nk in range(1, max_nk + 1):
        if Kp % nk:
            continue
        tk = Kp // nk
        if tk % 128:
            continue
        if 2 * 4 * tk * tn * w_itemsize <= w_budget:
            return tk
    return 128


def _choose_batch_tile(B, tk, tn, xh_itemsize, c_itemsize, out_itemsize,
                       w_itemsize, vmem_limit):
    """Prefer a single batch tile (W streamed once); only shrink when the f32
    accumulator + working set cannot fit the VMEM budget."""
    sub = 16 if xh_itemsize == 2 else 8           # bf16 sublane packing
    w_bytes = 2 * 4 * tk * tn * w_itemsize
    bias_bytes = 2 * 4 * 8 * tn * 4
    budget = int(0.85 * vmem_limit) - w_bytes - bias_bytes
    per_row = (4 * tn * 4                         # f32 accumulator (1-buf)
               + 2 * tk * xh_itemsize             # xh (double buffered)
               + 2 * tn * c_itemsize              # c  (double buffered)
               + 2 * 2 * tn * out_itemsize)       # ht, ct (double buffered)
    tb_full = _round_up(B, sub)
    if budget <= per_row * sub:
        return sub
    tb_cap = max(sub, (budget // per_row) // sub * sub)
    return max(sub, min(tb_full, tb_cap))


# ----------------------------------------------------------------------------
# Kernel.
# ----------------------------------------------------------------------------
def _lstm_cell_kernel(xh_ref, w_ref, b_ref, c_ref, ht_ref, ct_ref, acc_ref):
    """Grid = (batch tiles, column tiles, K tiles); K is the trailing
    reduction axis.  acc_ref: (4, tb, tn) f32 VMEM accumulator (gate-major)."""
    k = pl.program_id(2)
    tb, tn = acc_ref.shape[1], acc_ref.shape[2]

    @pl.when(k == 0)
    def _init():
        # Initialize the accumulator with the broadcast bias (saves a full
        # (tb, 4*tn) add + bias read from the serial finalize tail).
        for g in range(4):
            acc_ref[g] = jnp.broadcast_to(b_ref[g].astype(jnp.float32),
                                          (tb, tn))

    xh = xh_ref[...]
    for g in range(4):
        acc_ref[g] += jnp.dot(xh, w_ref[g],
                              preferred_element_type=jnp.float32)

    @pl.when(k == pl.num_programs(2) - 1)
    def _finalize():
        it = jax.nn.sigmoid(acc_ref[0])
        ft = jax.nn.sigmoid(acc_ref[1])
        ot = jax.nn.sigmoid(acc_ref[2])
        c_tilde = jnp.tanh(acc_ref[3])

        ct = ft * c_ref[...].astype(jnp.float32) + it * c_tilde
        ht = ot * jnp.tanh(ct)

        ct_ref[...] = ct.astype(ct_ref.dtype)
        ht_ref[...] = ht.astype(ht_ref.dtype)


# ----------------------------------------------------------------------------
# Wrapper.
# ----------------------------------------------------------------------------
@jax.jit
def lstm_cell(x, h, c, w_packed, b_packed):
    """x: (B, F), h/c: (B, H), w_packed: (4, Kp, Hp), b_packed: (4, 1, Hp)."""
    B, F = x.shape
    H = h.shape[-1]
    K = F + H
    Kp = _round_up(K, 128)
    Hp = _round_up(H, 128)
    assert w_packed.shape == (4, Kp, Hp), (w_packed.shape, (4, Kp, Hp))
    assert b_packed.shape == (4, 1, Hp), (b_packed.shape, (4, 1, Hp))
    out_dtype = x.dtype
    w_dt = w_packed.dtype

    # Activations: concatenate + pad (tiny: (B, Kp)); weights are pre-packed.
    xh = jnp.concatenate([x.astype(w_dt), h.astype(w_dt)], axis=-1)   # (B, K)
    xh = _pad_axis(xh, 1, Kp)                 # zero K padding -> no effect
    c_p = _pad_axis(c, 1, Hp)

    vmem_limit = _vmem_limit_bytes()
    w_budget = vmem_limit // 3                # double-buffered weight budget
    w_item = w_packed.dtype.itemsize
    xh_item = xh.dtype.itemsize
    c_item = c.dtype.itemsize
    out_item = jnp.dtype(out_dtype).itemsize

    # v7x: split the gate-column axis across the two TensorCores so each core
    # streams half of W (instead of duplicating W with batch-parallel).
    want_cols = 2 if _is_v7x() else 1
    n_n = _choose_column_tiles(Hp, w_item, w_budget, want_cols)
    tn = Hp // n_n
    tk = _choose_k_tile(Kp, tn, w_item, w_budget)
    tb = _choose_batch_tile(B, tk, tn, xh_item, c_item, out_item, w_item,
                            vmem_limit)

    Bp = _round_up(B, tb)
    xh = _pad_axis(xh, 0, Bp)
    c_p = _pad_axis(c_p, 0, Bp)

    grid = (Bp // tb, n_n, Kp // tk)

    ht_p, ct_p = pl.pallas_call(
        _lstm_cell_kernel,
        out_shape=(jax.ShapeDtypeStruct((Bp, Hp), out_dtype),
                   jax.ShapeDtypeStruct((Bp, Hp), out_dtype)),
        grid=grid,
        in_specs=[
            pl.BlockSpec((tb, tk), lambda i, j, k: (i, k)),        # xh
            pl.BlockSpec((4, tk, tn), lambda i, j, k: (0, k, j)),  # W packed
            pl.BlockSpec((4, 1, tn), lambda i, j, k: (0, 0, j)),   # bias
            pl.BlockSpec((tb, tn), lambda i, j, k: (i, j)),        # c
        ],
        out_specs=(
            pl.BlockSpec((tb, tn), lambda i, j, k: (i, j)),        # ht
            pl.BlockSpec((tb, tn), lambda i, j, k: (i, j)),        # ct
        ),
        scratch_shapes=[pltpu.VMEM((4, tb, tn), jnp.float32)],
        compiler_params=pltpu.CompilerParams(
            dimension_semantics=("parallel", "parallel", "arbitrary"),
            vmem_limit_bytes=vmem_limit,
        ),
    )(xh, w_packed, b_packed, c_p)

    return ht_p[:B, :H], ct_p[:B, :H]


# ----------------------------------------------------------------------------
# Parameters (mirrors the 8 nn.Linear layers of the PyTorch module).
# ----------------------------------------------------------------------------
def init_params(key, in_features, hide_features, dtype=jnp.float32):
    """Per-gate Linear params; weight stored (in, out), bias (out,).
    Init mimics nn.Linear's default U(-1/sqrt(fan_in), +1/sqrt(fan_in))."""
    names = ["Wi", "Wf", "Wo", "Wc", "Ui", "Uf", "Uo", "Uc"]
    fan_ins = [in_features] * 4 + [hide_features] * 4
    keys = jax.random.split(key, 2 * len(names))
    params = {}
    for n, (name, fan_in) in enumerate(zip(names, fan_ins)):
        bound = 1.0 / (fan_in ** 0.5)
        w = jax.random.uniform(keys[2 * n], (fan_in, hide_features), dtype,
                               -bound, bound)
        b = jax.random.uniform(keys[2 * n + 1], (hide_features,), dtype,
                               -bound, bound)
        params[name] = (w, b)
    return params


def prepare_params(params, matmul_dtype=jnp.bfloat16):
    """One-time packing: (4, Kp, Hp) gate-major weight in `matmul_dtype`
    (bf16 by default -> half the per-call W HBM traffic) and (4, 1, Hp) f32
    bias.  Gate order (i, f, o, c~) along the leading axis."""
    F = params["Wi"][0].shape[0]
    H = params["Ui"][0].shape[0]
    K = F + H
    Kp = _round_up(K, 128)
    Hp = _round_up(H, 128)

    def pack_gate(xg, hg):
        (Wx, _), (Wh, _) = params[xg], params[hg]
        w = jnp.concatenate([Wx, Wh], axis=0)                 # (K, H)
        return jnp.pad(w, ((0, Kp - K), (0, Hp - H)))

    def pack_bias(xg, hg):
        b = (params[xg][1] + params[hg][1]).astype(jnp.float32)
        return jnp.pad(b, (0, Hp - H)).reshape(1, Hp)

    gate_pairs = [("Wi", "Ui"), ("Wf", "Uf"), ("Wo", "Uo"), ("Wc", "Uc")]
    w_packed = jnp.stack([pack_gate(a, b) for a, b in gate_pairs], axis=0)
    b_packed = jnp.stack([pack_bias(a, b) for a, b in gate_pairs], axis=0)
    return w_packed.astype(matmul_dtype), b_packed


def reference_lstm_cell(x, h, c, params):
    def lin(name, v):
        w, b = params[name]
        return v @ w + b

    it = jax.nn.sigmoid(lin("Wi", x) + lin("Ui", h))
    ft = jax.nn.sigmoid(lin("Wf", x) + lin("Uf", h))
    ot = jax.nn.sigmoid(lin("Wo", x) + lin("Uo", h))
    c_tilde = jnp.tanh(lin("Wc", x) + lin("Uc", h))
    ct = ft * c + it * c_tilde
    ht = ot * jnp.tanh(ct)
    return ht, ct


if __name__ == "__main__":
    B = 8            # batch
    F = 16           # in_features
    H = 32           # hide_features

    key = jax.random.PRNGKey(0)
    kx, kh, kc, kp = jax.random.split(key, 4)
    x = jax.random.normal(kx, (B, F), jnp.float32)
    h = jax.random.normal(kh, (B, H), jnp.float32)
    c = jax.random.normal(kc, (B, H), jnp.float32)

    params = init_params(kp, F, H)
    ht_ref, ct_ref = reference_lstm_cell(x, h, c, params)

    # Exact path: f32 weights.
    w32, b32 = prepare_params(params, matmul_dtype=jnp.float32)
    ht, ct = lstm_cell(x, h, c, w32, b32)
    jax.block_until_ready((ht, ct))
    assert jnp.allclose(ht, ht_ref, atol=1e-5, rtol=1e-5)
    assert jnp.allclose(ct, ct_ref, atol=1e-5, rtol=1e-5)

    # Default path: bf16 weights/activations on the MXU, f32 accumulate +
    # f32 gating / cell-state math.
    wbf, bbf = prepare_params(params)
    ht_bf, ct_bf = lstm_cell(x, h, c, wbf, bbf)
    jax.block_until_ready((ht_bf, ct_bf))
    assert jnp.allclose(ht_bf, ht_ref, atol=5e-2, rtol=5e-2)
    assert jnp.allclose(ct_bf, ct_ref, atol=5e-2, rtol=5e-2)

    print("KERNEL_OK")
</pallas_src>

<mosaic_0001>
module attributes {stable_mosaic.version = 11 : i64} {
  func.func @_lstm_cell_kernel(%arg0: i32, %arg1: i32, %arg2: i32, %arg3: memref<8x128xf32, #tpu.memory_space<vmem>>, %arg4: memref<4x128x128xf32, #tpu.memory_space<vmem>>, %arg5: memref<4x1x128xf32, #tpu.memory_space<vmem>>, %arg6: memref<8x128xf32, #tpu.memory_space<vmem>>, %arg7: memref<8x128xf32, #tpu.memory_space<vmem>>, %arg8: memref<8x128xf32, #tpu.memory_space<vmem>>, %arg9: memref<4x8x128xf32, #tpu.memory_space<vmem>>) attributes {dimension_semantics = [#tpu.dimension_semantics<parallel>, #tpu.dimension_semantics<parallel>, #tpu.dimension_semantics<arbitrary>], iteration_bounds = array<i64: 1, 1, 1>, scalar_prefetch = 0 : i64, scratch_operands = 1 : i64, tpu.core_type = #tpu.core_type<tc>, window_params = [{transform_indices = @transform_0, window_bounds = array<i64: 8, 128>}, {transform_indices = @transform_1, window_bounds = array<i64: 4, 128, 128>}, {transform_indices = @transform_2, window_bounds = array<i64: 4, 1, 128>}, {transform_indices = @transform_3, window_bounds = array<i64: 8, 128>}, {transform_indices = @transform_4, window_bounds = array<i64: 8, 128>}, {transform_indices = @transform_5, window_bounds = array<i64: 8, 128>}]} {
    %c0_i32 = arith.constant 0 : i32
    %0 = arith.cmpi eq, %arg2, %c0_i32 : i32
    %1 = arith.extui %0 : i1 to i32
    %c0_i32_0 = arith.constant 0 : i32
    %2 = arith.cmpi ne, %1, %c0_i32_0 : i32
    scf.if %2 {
      %c0_40 = arith.constant 0 : index
      %c0_41 = arith.constant 0 : index
      %c0_42 = arith.constant 0 : index
      %43 = vector.load %arg5[%c0_40, %c0_41, %c0_42] : memref<4x1x128xf32, #tpu.memory_space<vmem>>, vector<1x1x128xf32>
      %44 = vector.shape_cast %43 : vector<1x1x128xf32> to vector<1x128xf32>
      %45 = vector.shape_cast %44 : vector<1x128xf32> to vector<1x128xf32>
      %46 = vector.broadcast %45 : vector<1x128xf32> to vector<8x128xf32>
      %c0_43 = arith.constant 0 : index
      %c0_44 = arith.constant 0 : index
      %c0_45 = arith.constant 0 : index
      %47 = vector.load %arg9[%c0_43, %c0_44, %c0_45] : memref<4x8x128xf32, #tpu.memory_space<vmem>>, vector<1x8x128xf32>
      %48 = vector.shape_cast %47 : vector<1x8x128xf32> to vector<8x128xf32>
      %49 = vector.shape_cast %46 : vector<8x128xf32> to vector<1x8x128xf32>
      tpu.vector_store %arg9[%c0_43, %c0_44, %c0_45], %49 {strides = array<i32>} : memref<4x8x128xf32, #tpu.memory_space<vmem>>, vector<1x8x128xf32>,
      %c1_46 = arith.constant 1 : index
      %c0_47 = arith.constant 0 : index
      %c0_48 = arith.constant 0 : index
      %50 = vector.load %arg5[%c1_46, %c0_47, %c0_48] : memref<4x1x128xf32, #tpu.memory_space<vmem>>, vector<1x1x128xf32>
      %51 = vector.shape_cast %50 : vector<1x1x128xf32> to vector<1x128xf32>
      %52 = vector.shape_cast %51 : vector<1x128xf32> to vector<1x128xf32>
      %53 = vector.broadcast %52 : vector<1x128xf32> to vector<8x128xf32>
      %c1_49 = arith.constant 1 : index
      %c0_50 = arith.constant 0 : index
      %c0_51 = arith.constant 0 : index
      %54 = vector.load %arg9[%c1_49, %c0_50, %c0_51] : memref<4x8x128xf32, #tpu.memory_space<vmem>>, vector<1x8x128xf32>
      %55 = vector.shape_cast %54 : vector<1x8x128xf32> to vector<8x128xf32>
      %56 = vector.shape_cast %53 : vector<8x128xf32> to vector<1x8x128xf32>
      tpu.vector_store %arg9[%c1_49, %c0_50, %c0_51], %56 {strides = array<i32>} : memref<4x8x128xf32, #tpu.memory_space<vmem>>, vector<1x8x128xf32>,
      %c2_52 = arith.constant 2 : index
      %c0_53 = arith.constant 0 : index
      %c0_54 = arith.constant 0 : index
      %57 = vector.load %arg5[%c2_52, %c0_53, %c0_54] : memref<4x1x128xf32, #tpu.memory_space<vmem>>, vector<1x1x128xf32>
      %58 = vector.shape_cast %57 : vector<1x1x128xf32> to vector<1x128xf32>
      %59 = vector.shape_cast %58 : vector<1x128xf32> to vector<1x128xf32>
      %60 = vector.broadcast %59 : vector<1x128xf32> to vector<8x128xf32>
      %c2_55 = arith.constant 2 : index
      %c0_56 = arith.constant 0 : index
      %c0_57 = arith.constant 0 : index
      %61 = vector.load %arg9[%c2_55, %c0_56, %c0_57] : memref<4x8x128xf32, #tpu.memory_space<vmem>>, vector<1x8x128xf32>
      %62 = vector.shape_cast %61 : vector<1x8x128xf32> to vector<8x128xf32>
      %63 = vector.shape_cast %60 : vector<8x128xf32> to vector<1x8x128xf32>
      tpu.vector_store %arg9[%c2_55, %c0_56, %c0_57], %63 {strides = array<i32>} : memref<4x8x128xf32, #tpu.memory_space<vmem>>, vector<1x8x128xf32>,
      %c3_58 = arith.constant 3 : index
      %c0_59 = arith.constant 0 : index
      %c0_60 = arith.constant 0 : index
      %64 = vector.load %arg5[%c3_58, %c0_59, %c0_60] : memref<4x1x128xf32, #tpu.memory_space<vmem>>, vector<1x1x128xf32>
      %65 = vector.shape_cast %64 : vector<1x1x128xf32> to vector<1x128xf32>
      %66 = vector.shape_cast %65 : vector<1x128xf32> to vector<1x128xf32>
      %67 = vector.broadcast %66 : vector<1x128xf32> to vector<8x128xf32>
      %c3_61 = arith.constant 3 : index
      %c0_62 = arith.constant 0 : index
      %c0_63 = arith.constant 0 : index
      %68 = vector.load %arg9[%c3_61, %c0_62, %c0_63] : memref<4x8x128xf32, #tpu.memory_space<vmem>>, vector<1x8x128xf32>
      %69 = vector.shape_cast %68 : vector<1x8x128xf32> to vector<8x128xf32>
      %70 = vector.shape_cast %67 : vector<8x128xf32> to vector<1x8x128xf32>
      tpu.vector_store %arg9[%c3_61, %c0_62, %c0_63], %70 {strides = array<i32>} : memref<4x8x128xf32, #tpu.memory_space<vmem>>, vector<1x8x128xf32>,
    } else {
    }
    %c0 = arith.constant 0 : index
    %c0_1 = arith.constant 0 : index
    %3 = vector.load %arg3[%c0, %c0_1] : memref<8x128xf32, #tpu.memory_space<vmem>>, vector<8x128xf32>
    %c0_2 = arith.constant 0 : index
    %c0_3 = arith.constant 0 : index
    %c0_4 = arith.constant 0 : index
    %4 = vector.load %arg9[%c0_2, %c0_3, %c0_4] : memref<4x8x128xf32, #tpu.memory_space<vmem>>, vector<1x8x128xf32>
    %5 = vector.shape_cast %4 : vector<1x8x128xf32> to vector<8x128xf32>
    %c0_5 = arith.constant 0 : index
    %c0_6 = arith.constant 0 : index
    %c0_7 = arith.constant 0 : index
    %6 = vector.load %arg4[%c0_5, %c0_6, %c0_7] : memref<4x128x128xf32, #tpu.memory_space<vmem>>, vector<1x128x128xf32>
    %7 = vector.shape_cast %6 : vector<1x128x128xf32> to vector<128x128xf32>
    %cst = arith.constant dense<0.000000e+00> : vector<8x128xf32>
    %8 = tpu.matmul %3, %7, %cst {dimension_numbers = #tpu.dot_dimension_numbers<[1], [0], [0], [1], [0, 0, 1, 1], [], []>} : vector<8x128xf32>, vector<128x128xf32>, vector<8x128xf32> -> vector<8x128xf32>
    %9 = arith.addf %5, %8 : vector<8x128xf32>
    %c0_8 = arith.constant 0 : index
    %c0_9 = arith.constant 0 : index
    %c0_10 = arith.constant 0 : index
    %10 = vector.load %arg9[%c0_8, %c0_9, %c0_10] : memref<4x8x128xf32, #tpu.memory_space<vmem>>, vector<1x8x128xf32>
    %11 = vector.shape_cast %10 : vector<1x8x128xf32> to vector<8x128xf32>
    %12 = vector.shape_cast %9 : vector<8x128xf32> to vector<1x8x128xf32>
    tpu.vector_store %arg9[%c0_8, %c0_9, %c0_10], %12 {strides = array<i32>} : memref<4x8x128xf32, #tpu.memory_space<vmem>>, vector<1x8x128xf32>,
    %c1 = arith.constant 1 : index
    %c0_11 = arith.constant 0 : index
    %c0_12 = arith.constant 0 : index
    %13 = vector.load %arg9[%c1, %c0_11, %c0_12] : memref<4x8x128xf32, #tpu.memory_space<vmem>>, vector<1x8x128xf32>
    %14 = vector.shape_cast %13 : vector<1x8x128xf32> to vector<8x128xf32>
    %c1_13 = arith.constant 1 : index
    %c0_14 = arith.constant 0 : index
    %c0_15 = arith.constant 0 : index
    %15 = vector.load %arg4[%c1_13, %c0_14, %c0_15] : memref<4x128x128xf32, #tpu.memory_space<vmem>>, vector<1x128x128xf32>
    %16 = vector.shape_cast %15 : vector<1x128x128xf32> to vector<128x128xf32>
    %cst_16 = arith.constant dense<0.000000e+00> : vector<8x128xf32>
    %17 = tpu.matmul %3, %16, %cst_16 {dimension_numbers = #tpu.dot_dimension_numbers<[1], [0], [0], [1], [0, 0, 1, 1], [], []>} : vector<8x128xf32>, vector<128x128xf32>, vector<8x128xf32> -> vector<8x128xf32>
    %18 = arith.addf %14, %17 : vector<8x128xf32>
    %c1_17 = arith.constant 1 : index
    %c0_18 = arith.constant 0 : index
    %c0_19 = arith.constant 0 : index
    %19 = vector.load %arg9[%c1_17, %c0_18, %c0_19] : memref<4x8x128xf32, #tpu.memory_space<vmem>>, vector<1x8x128xf32>
    %20 = vector.shape_cast %19 : vector<1x8x128xf32> to vector<8x128xf32>
    %21 = vector.shape_cast %18 : vector<8x128xf32> to vector<1x8x128xf32>
    tpu.vector_store %arg9[%c1_17, %c0_18, %c0_19], %21 {strides = array<i32>} : memref<4x8x128xf32, #tpu.memory_space<vmem>>, vector<1x8x128xf32>,
    %c2 = arith.constant 2 : index
    %c0_20 = arith.constant 0 : index
    %c0_21 = arith.constant 0 : index
    %22 = vector.load %arg9[%c2, %c0_20, %c0_21] : memref<4x8x128xf32, #tpu.memory_space<vmem>>, vector<1x8x128xf32>
    %23 = vector.shape_cast %22 : vector<1x8x128xf32> to vector<8x128xf32>
    %c2_22 = arith.constant 2 : index
    %c0_23 = arith.constant 0 : index
    %c0_24 = arith.constant 0 : index
    %24 = vector.load %arg4[%c2_22, %c0_23, %c0_24] : memref<4x128x128xf32, #tpu.memory_space<vmem>>, vector<1x128x128xf32>
    %25 = vector.shape_cast %24 : vector<1x128x128xf32> to vector<128x128xf32>
    %cst_25 = arith.constant dense<0.000000e+00> : vector<8x128xf32>
    %26 = tpu.matmul %3, %25, %cst_25 {dimension_numbers = #tpu.dot_dimension_numbers<[1], [0], [0], [1], [0, 0, 1, 1], [], []>} : vector<8x128xf32>, vector<128x128xf32>, vector<8x128xf32> -> vector<8x128xf32>
    %27 = arith.addf %23, %26 : vector<8x128xf32>
    %c2_26 = arith.constant 2 : index
    %c0_27 = arith.constant 0 : index
    %c0_28 = arith.constant 0 : index
    %28 = vector.load %arg9[%c2_26, %c0_27, %c0_28] : memref<4x8x128xf32, #tpu.memory_space<vmem>>, vector<1x8x128xf32>
    %29 = vector.shape_cast %28 : vector<1x8x128xf32> to vector<8x128xf32>
    %30 = vector.shape_cast %27 : vector<8x128xf32> to vector<1x8x128xf32>
    tpu.vector_store %arg9[%c2_26, %c0_27, %c0_28], %30 {strides = array<i32>} : memref<4x8x128xf32, #tpu.memory_space<vmem>>, vector<1x8x128xf32>,
    %c3 = arith.constant 3 : index
    %c0_29 = arith.constant 0 : index
    %c0_30 = arith.constant 0 : index
    %31 = vector.load %arg9[%c3, %c0_29, %c0_30] : memref<4x8x128xf32, #tpu.memory_space<vmem>>, vector<1x8x128xf32>
    %32 = vector.shape_cast %31 : vector<1x8x128xf32> to vector<8x128xf32>
    %c3_31 = arith.constant 3 : index
    %c0_32 = arith.constant 0 : index
    %c0_33 = arith.constant 0 : index
    %33 = vector.load %arg4[%c3_31, %c0_32, %c0_33] : memref<4x128x128xf32, #tpu.memory_space<vmem>>, vector<1x128x128xf32>
    %34 = vector.shape_cast %33 : vector<1x128x128xf32> to vector<128x128xf32>
    %cst_34 = arith.constant dense<0.000000e+00> : vector<8x128xf32>
    %35 = tpu.matmul %3, %34, %cst_34 {dimension_numbers = #tpu.dot_dimension_numbers<[1], [0], [0], [1], [0, 0, 1, 1], [], []>} : vector<8x128xf32>, vector<128x128xf32>, vector<8x128xf32> -> vector<8x128xf32>
    %36 = arith.addf %32, %35 : vector<8x128xf32>
    %c3_35 = arith.constant 3 : index
    %c0_36 = arith.constant 0 : index
    %c0_37 = arith.constant 0 : index
    %37 = vector.load %arg9[%c3_35, %c0_36, %c0_37] : memref<4x8x128xf32, #tpu.memory_space<vmem>>, vector<1x8x128xf32>
    %38 = vector.shape_cast %37 : vector<1x8x128xf32> to vector<8x128xf32>
    %39 = vector.shape_cast %36 : vector<8x128xf32> to vector<1x8x128xf32>
    tpu.vector_store %arg9[%c3_35, %c0_36, %c0_37], %39 {strides = array<i32>} : memref<4x8x128xf32, #tpu.memory_space<vmem>>, vector<1x8x128xf32>,
    %c0_i32_38 = arith.constant 0 : i32
    %40 = arith.cmpi eq, %arg2, %c0_i32_38 : i32
    %41 = arith.extui %40 : i1 to i32
    %c0_i32_39 = arith.constant 0 : i32
    %42 = arith.cmpi ne, %41, %c0_i32_39 : i32
    scf.if %42 {
      %c0_40 = arith.constant 0 : index
      %c0_41 = arith.constant 0 : index
      %c0_42 = arith.constant 0 : index
      %43 = vector.load %arg9[%c0_40, %c0_41, %c0_42] : memref<4x8x128xf32, #tpu.memory_space<vmem>>, vector<1x8x128xf32>
      %44 = vector.shape_cast %43 : vector<1x8x128xf32> to vector<8x128xf32>
      %45 = arith.negf %44 : vector<8x128xf32>
      %46 = math.exp %45 : vector<8x128xf32>
      %cst_43 = arith.constant 1.000000e+00 : f32
      %47 = vector.broadcast %cst_43 : f32 to vector<8x128xf32>
      %48 = arith.addf %47, %46 : vector<8x128xf32>
      %49 = arith.divf %47, %48 : vector<8x128xf32>
      %c1_44 = arith.constant 1 : index
      %c0_45 = arith.constant 0 : index
      %c0_46 = arith.constant 0 : index
      %50 = vector.load %arg9[%c1_44, %c0_45, %c0_46] : memref<4x8x128xf32, #tpu.memory_space<vmem>>, vector<1x8x128xf32>
      %51 = vector.shape_cast %50 : vector<1x8x128xf32> to vector<8x128xf32>
      %52 = arith.negf %51 : vector<8x128xf32>
      %53 = math.exp %52 : vector<8x128xf32>
      %cst_47 = arith.constant 1.000000e+00 : f32
      %54 = vector.broadcast %cst_47 : f32 to vector<8x128xf32>
      %55 = arith.addf %54, %53 : vector<8x128xf32>
      %56 = arith.divf %54, %55 : vector<8x128xf32>
      %c2_48 = arith.constant 2 : index
      %c0_49 = arith.constant 0 : index
      %c0_50 = arith.constant 0 : index
      %57 = vector.load %arg9[%c2_48, %c0_49, %c0_50] : memref<4x8x128xf32, #tpu.memory_space<vmem>>, vector<1x8x128xf32>
      %58 = vector.shape_cast %57 : vector<1x8x128xf32> to vector<8x128xf32>
      %59 = arith.negf %58 : vector<8x128xf32>
      %60 = math.exp %59 : vector<8x128xf32>
      %cst_51 = arith.constant 1.000000e+00 : f32
      %61 = vector.broadcast %cst_51 : f32 to vector<8x128xf32>
      %62 = arith.addf %61, %60 : vector<8x128xf32>
      %63 = arith.divf %61, %62 : vector<8x128xf32>
      %c3_52 = arith.constant 3 : index
      %c0_53 = arith.constant 0 : index
      %c0_54 = arith.constant 0 : index
      %64 = vector.load %arg9[%c3_52, %c0_53, %c0_54] : memref<4x8x128xf32, #tpu.memory_space<vmem>>, vector<1x8x128xf32>
      %65 = vector.shape_cast %64 : vector<1x8x128xf32> to vector<8x128xf32>
      %66 = math.tanh %65 : vector<8x128xf32>
      %c0_55 = arith.constant 0 : index
      %c0_56 = arith.constant 0 : index
      %67 = vector.load %arg6[%c0_55, %c0_56] : memref<8x128xf32, #tpu.memory_space<vmem>>, vector<8x128xf32>
      %68 = arith.mulf %56, %67 : vector<8x128xf32>
      %69 = arith.mulf %49, %66 : vector<8x128xf32>
      %70 = arith.addf %68, %69 : vector<8x128xf32>
      %71 = math.tanh %70 : vector<8x128xf32>
      %72 = arith.mulf %63, %71 : vector<8x128xf32>
      %c0_57 = arith.constant 0 : index
      %c0_58 = arith.constant 0 : index
      %73 = vector.load %arg8[%c0_57, %c0_58] : memref<8x128xf32, #tpu.memory_space<vmem>>, vector<8x128xf32>
      tpu.vector_store %arg8[%c0_57, %c0_58], %70 {strides = array<i32>} : memref<8x128xf32, #tpu.memory_space<vmem>>, vector<8x128xf32>,
      %c0_59 = arith.constant 0 : index
      %c0_60 = arith.constant 0 : index
      %74 = vector.load %arg7[%c0_59, %c0_60] : memref<8x128xf32, #tpu.memory_space<vmem>>, vector<8x128xf32>
      tpu.vector_store %arg7[%c0_59, %c0_60], %72 {strides = array<i32>} : memref<8x128xf32, #tpu.memory_space<vmem>>, vector<8x128xf32>,
    } else {
    }
    return
  }
  func.func @transform_0(%arg0: i32, %arg1: i32, %arg2: i32) -> (i32, i32) {
    %c0_i32 = arith.constant 0 : i32
    return %arg0, %arg2 : i32, i32
  }
  func.func @transform_1(%arg0: i32, %arg1: i32, %arg2: i32) -> (i32, i32, i32) {
    %c0_i32 = arith.constant 0 : i32
    %c0_i32_0 = arith.constant 0 : i32
    return %c0_i32, %arg2, %arg1 : i32, i32, i32
  }
  func.func @transform_2(%arg0: i32, %arg1: i32, %arg2: i32) -> (i32, i32, i32) {
    %c0_i32 = arith.constant 0 : i32
    %c0_i32_0 = arith.constant 0 : i32
    %c0_i32_1 = arith.constant 0 : i32
    return %c0_i32, %c0_i32_0, %arg1 : i32, i32, i32
  }
  func.func @transform_3(%arg0: i32, %arg1: i32, %arg2: i32) -> (i32, i32) {
    %c0_i32 = arith.constant 0 : i32
    return %arg0, %arg1 : i32, i32
  }
  func.func @transform_4(%arg0: i32, %arg1: i32, %arg2: i32) -> (i32, i32) {
    %c0_i32 = arith.constant 0 : i32
    return %arg0, %arg1 : i32, i32
  }
  func.func @transform_5(%arg0: i32, %arg1: i32, %arg2: i32) -> (i32, i32) {
    %c0_i32 = arith.constant 0 : i32
    return %arg0, %arg1 : i32, i32
  }
}

</mosaic_0001>

<llo_original>
// kernel: lstm_cell.1
$region0: #{lstm_cell.1}
  #allocation0 [shape = 'u32[]', space=smem, size = 0x4, offset = 0x4, fixed_abs, tag = 'smem constant byte address 0x4 - core index']
  #allocation1 [shape = 'u32[144,128]{1,0:T(1,128)}', space=vmem, size = 0x12000, scoped, tag = 'internal scratch']
  #allocation2 [shape = 'f32[4,8,128]{2,1,0:T(8,128)}', space=vmem, size = 0x4000, scoped, tag = 'scratch operand']
  %s0 = inlined_call_operand.vmem [shape: f32[8,128], index: 0, kind: input, shape index: {}]
  %s1 = inlined_call_operand.hbm [shape: f32[4,128,128], index: 1, kind: input, shape index: {}]
  %s2 = inlined_call_operand.vmem [shape: f32[4,1,128], index: 2, kind: input, shape index: {}]
  %s3 = inlined_call_operand.vmem [shape: f32[8,128], index: 3, kind: input, shape index: {}]
  %s4 = inlined_call_operand.hbm [shape: f32[8,128], index: 4, kind: output, shape index: {0}]
  %s5 = inlined_call_operand.hbm [shape: f32[8,128], index: 5, kind: output, shape index: {1}]
  %6 = xla_tuple %s4, %s5
  %s7 = sld [smem:[#allocation0]]
  $region46: #{lstm_cell.1} parent=0
    _
  %s9 = ssub.s32 1, %s7
  %s10 = scalar_select 0, %s9, %s7
  $region1: #{lstm_cell.1} parent=0
    #allocation3 [shape = 'u8[262144]{0}', space=vmem, size = 0x40000, scoped, tag = 'input window, operand 1, single buffered']
    #allocation4 [shape = 's32[1]{0}', space=sflag, size = 0x4, scoped, tag = 'scoped memory for lstm_cell.1']
    #allocation5 [shape = 's32[1]{0}', space=sflag, size = 0x4, scoped, tag = 'scoped memory for lstm_cell.1']
    #allocation6 [shape = 'u8[4096]{0}', space=vmem, size = 0x1000, scoped, tag = 'output window, operand 0, single buffered']
    #allocation7 [shape = 'u8[4096]{0}', space=vmem, size = 0x1000, scoped, tag = 'output window, operand 1, single buffered']
    #allocation8 [shape = 's32[1]{0}', space=sflag, size = 0x4, scoped, tag = 'scoped memory for lstm_cell.1']
    %11 = vsyncpa [#allocation4], 0
    %12 = vsyncpa [#allocation5], 0
    %13 = vsyncpa [#allocation8], 0
    // Predicated region
    $region2: #{lstm_cell.1} parent=1 // pred_check
      _
    $region3: #{lstm_cell.1} parent=1 // pred_check_branch
      %15 = sbr.rel (0) target = $region5
    $region4: #{lstm_cell.1} parent=1 // pred_region
      _
    $region5: #{lstm_cell.1} parent=1 // pred_fallthru
      _
    // Predicated region
    $region6: #{lstm_cell.1} parent=1 // pred_check
      _
    $region7: #{lstm_cell.1} parent=1 // pred_check_branch
      %17 = sbr.rel (0) target = $region9
    $region8: #{lstm_cell.1} parent=1 // pred_region
      %s19 = ssub.s32 8192, 8192
      %20 = vsyncadd [#allocation4], %s19
      %s21 = sshll.u32 [#allocation3], 4
      %s22 = int_to_ptr.vmem [resolvable:$true] %s21
      %27 = dma.hbm_to_vmem [thread:$0]  %s1, 8192, %s22, [#allocation4], 128, 128, 8
    $region9: #{lstm_cell.1} parent=1 // pred_fallthru
      _
    // Predicated region
    $region10: #{lstm_cell.1} parent=1 // pred_check
      _
    $region11: #{lstm_cell.1} parent=1 // pred_check_branch
      %29 = sbr.rel (0) target = $region13
    $region12: #{lstm_cell.1} parent=1 // pred_region
      _
    $region13: #{lstm_cell.1} parent=1 // pred_fallthru
      _
    // Predicated region
    $region14: #{lstm_cell.1} parent=1 // pred_check
      _
    $region15: #{lstm_cell.1} parent=1 // pred_check_branch
      %31 = sbr.rel (0) target = $region17
    $region16: #{lstm_cell.1} parent=1 // pred_region
      _
    $region17: #{lstm_cell.1} parent=1 // pred_fallthru
      _
    // Predicated region
    $region18: #{lstm_cell.1} parent=1 // pred_check
      _
    $region19: #{lstm_cell.1} parent=1 // pred_check_branch
      %33 = sbr.rel (0) target = $region21
    $region20: #{lstm_cell.1} parent=1 // pred_region
      %34 = dma.done [#allocation4], 8192
    $region21: #{lstm_cell.1} parent=1 // pred_fallthru
      _
    %p35 = scmp.eq.s32.totalorder 0, 0
    // Predicated region
    $region22: #{lstm_cell.1} parent=1 // pred_check
      %p36 = pneg %p35
    $region23: #{lstm_cell.1} parent=1 // pred_check_branch
      %38 = sbr.rel (%p36) target = $region25
    $region24: #{lstm_cell.1} parent=1 // pred_region
      %v39 = vld [vmem:[%s2] sm:$0x1]
      %v41 = vlaneseq
      %v42 = vshrl.u32 %v41, 7
      %v43 = vsub.s32 0, %v42
      %v44 = vrot.slane %v39, %v43
      %46 = vst [vmem:[#allocation2] sm:$0xff] %v44
      %s47 = scalar_lea.vmem %s2, 1
      %v48 = vld [vmem:[%s47] sm:$0x1]
      %v50 = vlaneseq
      %v51 = vshrl.u32 %v50, 7
      %v52 = vsub.s32 0, %v51
      %v53 = vrot.slane %v48, %v52
      %s55 = scalar_lea.vmem [#allocation2], 8
      %56 = vst [vmem:[%s55] sm:$0xff] %v53
      %s57 = scalar_lea.vmem %s2, 2
      %v58 = vld [vmem:[%s57] sm:$0x1]
      %v60 = vlaneseq
      %v61 = vshrl.u32 %v60, 7
      %v62 = vsub.s32 0, %v61
      %v63 = vrot.slane %v58, %v62
      %s65 = scalar_lea.vmem [#allocation2], 16
      %66 = vst [vmem:[%s65] sm:$0xff] %v63
      %s67 = scalar_lea.vmem %s2, 3
      %v68 = vld [vmem:[%s67] sm:$0x1]
      %v70 = vlaneseq
      %v71 = vshrl.u32 %v70, 7
      %v72 = vsub.s32 0, %v71
      %v73 = vrot.slane %v68, %v72
      %s75 = scalar_lea.vmem [#allocation2], 24
      %76 = vst [vmem:[%s75] sm:$0xff] %v73
    $region25: #{lstm_cell.1} parent=1 // pred_fallthru
      _
    %v77 = vld [vmem:[%s0] sm:$0xff]
    %v78 = vld [vmem:[#allocation2] sm:$0xff]
    %v79 = vld [vmem:[#allocation3] sm:$0xff]
    %v80 = vld [vmem:[#allocation3 + $0x8] sm:$0xff]
    %v81 = vld [vmem:[#allocation3 + $0x10] sm:$0xff]
    %v82 = vld [vmem:[#allocation3 + $0x18] sm:$0xff]
    %v83 = vld [vmem:[#allocation3 + $0x20] sm:$0xff]
    %v84 = vld [vmem:[#allocation3 + $0x28] sm:$0xff]
    %v85 = vld [vmem:[#allocation3 + $0x30] sm:$0xff]
    %v86 = vld [vmem:[#allocation3 + $0x38] sm:$0xff]
    %v87 = vld [vmem:[#allocation3 + $0x40] sm:$0xff]
    %v88 = vld [vmem:[#allocation3 + $0x48] sm:$0xff]
    %v89 = vld [vmem:[#allocation3 + $0x50] sm:$0xff]
    %v90 = vld [vmem:[#allocation3 + $0x58] sm:$0xff]
    %v91 = vld [vmem:[#allocation3 + $0x60] sm:$0xff]
    %v92 = vld [vmem:[#allocation3 + $0x68] sm:$0xff]
    %v93 = vld [vmem:[#allocation3 + $0x70] sm:$0xff]
    %v94 = vld [vmem:[#allocation3 + $0x78] sm:$0xff]
    %95 = vmatprep.subr.mxu0 0.0
    %96 = vmatpush1.msra.mxu0 %v94
    %97 = vmatprep.subr.mxu0 0.0
    %98 = vmatpush1.msra.mxu0 %v93
    %99 = vmatprep.subr.mxu0 0.0
    %100 = vmatpush1.msra.mxu0 %v92
    %101 = vmatprep.subr.mxu0 0.0
    %102 = vmatpush1.msra.mxu0 %v91
    %103 = vmatprep.subr.mxu0 0.0
    %104 = vmatpush1.msra.mxu0 %v90
    %105 = vmatprep.subr.mxu0 0.0
    %106 = vmatpush1.msra.mxu0 %v89
    %107 = vmatprep.subr.mxu0 0.0
    %108 = vmatpush1.msra.mxu0 %v88
    %109 = vmatprep.subr.mxu0 0.0
    %110 = vmatpush1.msra.mxu0 %v87
    %111 = vmatprep.subr.mxu0 0.0
    %112 = vmatpush1.msra.mxu0 %v86
    %113 = vmatprep.subr.mxu0 0.0
    %114 = vmatpush1.msra.mxu0 %v85
    %115 = vmatprep.subr.mxu0 0.0
    %116 = vmatpush1.msra.mxu0 %v84
    %117 = vmatprep.subr.mxu0 0.0
    %118 = vmatpush1.msra.mxu0 %v83
    %119 = vmatprep.subr.mxu0 0.0
    %120 = vmatpush1.msra.mxu0 %v82
    %121 = vmatprep.subr.mxu0 0.0
    %122 = vmatpush1.msra.mxu0 %v81
    %123 = vmatprep.subr.mxu0 0.0
    %124 = vmatpush1.msra.mxu0 %v80
    %125 = vmatprep.subr.mxu0 0.0
    %126 = vmatpush1.msra.mxu0 %v79
    %127 = vmatprep.subr.mxu0 0.0
    %128 = vmatpush2.msra.mxu0 0.0
    %129 = vmatprep.subr.mxu0 0.0
    %130 = vmatpush2.msra.mxu0 0.0
    %131 = vmatprep.subr.mxu0 0.0
    %132 = vmatpush2.msra.mxu0 0.0
    %133 = vmatprep.subr.mxu0 0.0
    %134 = vmatpush2.msra.mxu0 0.0
    %135 = vmatprep.subr.mxu0 0.0
    %136 = vmatpush2.msra.mxu0 0.0
    %137 = vmatprep.subr.mxu0 0.0
    %138 = vmatpush2.msra.mxu0 0.0
    %139 = vmatprep.subr.mxu0 0.0
    %140 = vmatpush2.msra.mxu0 0.0
    %141 = vmatprep.subr.mxu0 0.0
    %142 = vmatpush2.msra.mxu0 0.0
    %143 = vmatprep.subr.mxu0 0.0
    %144 = vmatpush2.msra.mxu0 0.0
    %145 = vmatprep.subr.mxu0 0.0
    %146 = vmatpush2.msra.mxu0 0.0
    %147 = vmatprep.subr.mxu0 0.0
    %148 = vmatpush2.msra.mxu0 0.0
    %149 = vmatprep.subr.mxu0 0.0
    %150 = vmatpush2.msra.mxu0 0.0
    %151 = vmatprep.subr.mxu0 0.0
    %152 = vmatpush2.msra.mxu0 0.0
    %153 = vmatprep.subr.mxu0 0.0
    %154 = vmatpush2.msra.mxu0 0.0
    %155 = vmatprep.subr.mxu0 0.0
    %156 = vmatpush2.msra.mxu0 0.0
    %157 = vmatprep.subr.mxu0 0.0
    %158 = vmatpush2.msra.mxu0 0.0
    %159 = vmatprep.mubr.f32.mxu0 0.0
    %160 = vmatmul.mubr.f32.gmra.mxu0 %v77
    %v161 = vpop.f32.mrf.mxu0
    %v162 = vadd.f32 0.0, %v161
    %v163 = vpop.f32.mrf.mxu0
    %164 = vdwg.mxu0
    %v165 = vadd.f32 %v78, %v162
    %166 = vst [vmem:[#allocation2] sm:$0xff] %v165
    %s167 = scalar_lea.vmem [#allocation2], 8
    %v168 = vld [vmem:[%s167] sm:$0xff]
    %s169 = scalar_lea.vmem [#allocation3], 128
    %v170 = vld [vmem:[%s169] sm:$0xff]
    %v171 = vld [vmem:[%s169 + $0x8] sm:$0xff]
    %v172 = vld [vmem:[%s169 + $0x10] sm:$0xff]
    %v173 = vld [vmem:[%s169 + $0x18] sm:$0xff]
    %v174 = vld [vmem:[%s169 + $0x20] sm:$0xff]
    %v175 = vld [vmem:[%s169 + $0x28] sm:$0xff]
    %v176 = vld [vmem:[%s169 + $0x30] sm:$0xff]
    %v177 = vld [vmem:[%s169 + $0x38] sm:$0xff]
    %v178 = vld [vmem:[%s169 + $0x40] sm:$0xff]
    %v179 = vld [vmem:[%s169 + $0x48] sm:$0xff]
    %v180 = vld [vmem:[%s169 + $0x50] sm:$0xff]
    %v181 = vld [vmem:[%s169 + $0x58] sm:$0xff]
    %v182 = vld [vmem:[%s169 + $0x60] sm:$0xff]
    %v183 = vld [vmem:[%s169 + $0x68] sm:$0xff]
    %v184 = vld [vmem:[%s169 + $0x70] sm:$0xff]
    %v185 = vld [vmem:[%s169 + $0x78] sm:$0xff]
    %186 = vmatprep.subr.mxu0 0.0
    %187 = vmatpush1.msra.mxu0 %v185
    %188 = vmatprep.subr.mxu0 0.0
    %189 = vmatpush1.msra.mxu0 %v184
    %190 = vmatprep.subr.mxu0 0.0
    %191 = vmatpush1.msra.mxu0 %v183
    %192 = vmatprep.subr.mxu0 0.0
    %193 = vmatpush1.msra.mxu0 %v182
    %194 = vmatprep.subr.mxu0 0.0
    %195 = vmatpush1.msra.mxu0 %v181
    %196 = vmatprep.subr.mxu0 0.0
    %197 = vmatpush1.msra.mxu0 %v180
    %198 = vmatprep.subr.mxu0 0.0
    %199 = vmatpush1.msra.mxu0 %v179
    %200 = vmatprep.subr.mxu0 0.0
    %201 = vmatpush1.msra.mxu0 %v178
    %202 = vmatprep.subr.mxu0 0.0
    %203 = vmatpush1.msra.mxu0 %v177
    %204 = vmatprep.subr.mxu0 0.0
    %205 = vmatpush1.msra.mxu0 %v176
    %206 = vmatprep.subr.mxu0 0.0
    %207 = vmatpush1.msra.mxu0 %v175
    %208 = vmatprep.subr.mxu0 0.0
    %209 = vmatpush1.msra.mxu0 %v174
    %210 = vmatprep.subr.mxu0 0.0
    %211 = vmatpush1.msra.mxu0 %v173
    %212 = vmatprep.subr.mxu0 0.0
    %213 = vmatpush1.msra.mxu0 %v172
    %214 = vmatprep.subr.mxu0 0.0
    %215 = vmatpush1.msra.mxu0 %v171
    %216 = vmatprep.subr.mxu0 0.0
    %217 = vmatpush1.msra.mxu0 %v170
    %218 = vmatprep.subr.mxu0 0.0
    %219 = vmatpush2.msra.mxu0 0.0
    %220 = vmatprep.subr.mxu0 0.0
    %221 = vmatpush2.msra.mxu0 0.0
    %222 = vmatprep.subr.mxu0 0.0
    %223 = vmatpush2.msra.mxu0 0.0
    %224 = vmatprep.subr.mxu0 0.0
    %225 = vmatpush2.msra.mxu0 0.0
    %226 = vmatprep.subr.mxu0 0.0
    %227 = vmatpush2.msra.mxu0 0.0
    %228 = vmatprep.subr.mxu0 0.0
    %229 = vmatpush2.msra.mxu0 0.0
    %230 = vmatprep.subr.mxu0 0.0
    %231 = vmatpush2.msra.mxu0 0.0
    %232 = vmatprep.subr.mxu0 0.0
    %233 = vmatpush2.msra.mxu0 0.0
    %234 = vmatprep.subr.mxu0 0.0
    %235 = vmatpush2.msra.mxu0 0.0
    %236 = vmatprep.subr.mxu0 0.0
    %237 = vmatpush2.msra.mxu0 0.0
    %238 = vmatprep.subr.mxu0 0.0
    %239 = vmatpush2.msra.mxu0 0.0
    %240 = vmatprep.subr.mxu0 0.0
    %241 = vmatpush2.msra.mxu0 0.0
    %242 = vmatprep.subr.mxu0 0.0
    %243 = vmatpush2.msra.mxu0 0.0
    %244 = vmatprep.subr.mxu0 0.0
    %245 = vmatpush2.msra.mxu0 0.0
    %246 = vmatprep.subr.mxu0 0.0
    %247 = vmatpush2.msra.mxu0 0.0
    %248 = vmatprep.subr.mxu0 0.0
    %249 = vmatpush2.msra.mxu0 0.0
    %250 = vmatprep.mubr.f32.mxu0 0.0
    %251 = vmatmul.mubr.f32.gmra.mxu0 %v77
    %v252 = vpop.f32.mrf.mxu0
    %v253 = vadd.f32 0.0, %v252
    %v254 = vpop.f32.mrf.mxu0
    %255 = vdwg.mxu0
    %v256 = vadd.f32 %v168, %v253
    %257 = vst [vmem:[%s167] sm:$0xff] %v256
    %s258 = scalar_lea.vmem [#allocation2], 16
    %v259 = vld [vmem:[%s258] sm:$0xff]
    %s260 = scalar_lea.vmem [#allocation3], 256
    %v261 = vld [vmem:[%s260] sm:$0xff]
    %v262 = vld [vmem:[%s260 + $0x8] sm:$0xff]
    %v263 = vld [vmem:[%s260 + $0x10] sm:$0xff]
    %v264 = vld [vmem:[%s260 + $0x18] sm:$0xff]
    %v265 = vld [vmem:[%s260 + $0x20] sm:$0xff]
    %v266 = vld [vmem:[%s260 + $0x28] sm:$0xff]
    %v267 = vld [vmem:[%s260 + $0x30] sm:$0xff]
    %v268 = vld [vmem:[%s260 + $0x38] sm:$0xff]
    %v269 = vld [vmem:[%s260 + $0x40] sm:$0xff]
    %v270 = vld [vmem:[%s260 + $0x48] sm:$0xff]
    %v271 = vld [vmem:[%s260 + $0x50] sm:$0xff]
    %v272 = vld [vmem:[%s260 + $0x58] sm:$0xff]
    %v273 = vld [vmem:[%s260 + $0x60] sm:$0xff]
    %v274 = vld [vmem:[%s260 + $0x68] sm:$0xff]
    %v275 = vld [vmem:[%s260 + $0x70] sm:$0xff]
    %v276 = vld [vmem:[%s260 + $0x78] sm:$0xff]
    %277 = vmatprep.subr.mxu0 0.0
    %278 = vmatpush1.msra.mxu0 %v276
    %279 = vmatprep.subr.mxu0 0.0
    %280 = vmatpush1.msra.mxu0 %v275
    %281 = vmatprep.subr.mxu0 0.0
    %282 = vmatpush1.msra.mxu0 %v274
    %283 = vmatprep.subr.mxu0 0.0
    %284 = vmatpush1.msra.mxu0 %v273
    %285 = vmatprep.subr.mxu0 0.0
    %286 = vmatpush1.msra.mxu0 %v272
    %287 = vmatprep.subr.mxu0 0.0
    %288 = vmatpush1.msra.mxu0 %v271
    %289 = vmatprep.subr.mxu0 0.0
    %290 = vmatpush1.msra.mxu0 %v270
    %291 = vmatprep.subr.mxu0 0.0
    %292 = vmatpush1.msra.mxu0 %v269
    %293 = vmatprep.subr.mxu0 0.0
    %294 = vmatpush1.msra.mxu0 %v268
    %295 = vmatprep.subr.mxu0 0.0
    %296 = vmatpush1.msra.mxu0 %v267
    %297 = vmatprep.subr.mxu0 0.0
    %298 = vmatpush1.msra.mxu0 %v266
    %299 = vmatprep.subr.mxu0 0.0
    %300 = vmatpush1.msra.mxu0 %v265
    %301 = vmatprep.subr.mxu0 0.0
    %302 = vmatpush1.msra.mxu0 %v264
    %303 = vmatprep.subr.mxu0 0.0
    %304 = vmatpush1.msra.mxu0 %v263
    %305 = vmatprep.subr.mxu0 0.0
    %306 = vmatpush1.msra.mxu0 %v262
    %307 = vmatprep.subr.mxu0 0.0
    %308 = vmatpush1.msra.mxu0 %v261
    %309 = vmatprep.subr.mxu0 0.0
    %310 = vmatpush2.msra.mxu0 0.0
    %311 = vmatprep.subr.mxu0 0.0
    %312 = vmatpush2.msra.mxu0 0.0
    %313 = vmatprep.subr.mxu0 0.0
    %314 = vmatpush2.msra.mxu0 0.0
    %315 = vmatprep.subr.mxu0 0.0
    %316 = vmatpush2.msra.mxu0 0.0
    %317 = vmatprep.subr.mxu0 0.0
    %318 = vmatpush2.msra.mxu0 0.0
    %319 = vmatprep.subr.mxu0 0.0
    %320 = vmatpush2.msra.mxu0 0.0
    %321 = vmatprep.subr.mxu0 0.0
    %322 = vmatpush2.msra.mxu0 0.0
    %323 = vmatprep.subr.mxu0 0.0
    %324 = vmatpush2.msra.mxu0 0.0
    %325 = vmatprep.subr.mxu0 0.0
    %326 = vmatpush2.msra.mxu0 0.0
    %327 = vmatprep.subr.mxu0 0.0
    %328 = vmatpush2.msra.mxu0 0.0
    %329 = vmatprep.subr.mxu0 0.0
    %330 = vmatpush2.msra.mxu0 0.0
    %331 = vmatprep.subr.mxu0 0.0
    %332 = vmatpush2.msra.mxu0 0.0
    %333 = vmatprep.subr.mxu0 0.0
    %334 = vmatpush2.msra.mxu0 0.0
    %335 = vmatprep.subr.mxu0 0.0
    %336 = vmatpush2.msra.mxu0 0.0
    %337 = vmatprep.subr.mxu0 0.0
    %338 = vmatpush2.msra.mxu0 0.0
    %339 = vmatprep.subr.mxu0 0.0
    %340 = vmatpush2.msra.mxu0 0.0
    %341 = vmatprep.mubr.f32.mxu0 0.0
    %342 = vmatmul.mubr.f32.gmra.mxu0 %v77
    %v343 = vpop.f32.mrf.mxu0
    %v344 = vadd.f32 0.0, %v343
    %v345 = vpop.f32.mrf.mxu0
    %346 = vdwg.mxu0
    %v347 = vadd.f32 %v259, %v344
    %348 = vst [vmem:[%s258] sm:$0xff] %v347
    %s349 = scalar_lea.vmem [#allocation2], 24
    %v350 = vld [vmem:[%s349] sm:$0xff]
    %s351 = scalar_lea.vmem [#allocation3], 384
    %v352 = vld [vmem:[%s351] sm:$0xff]
    %v353 = vld [vmem:[%s351 + $0x8] sm:$0xff]
    %v354 = vld [vmem:[%s351 + $0x10] sm:$0xff]
    %v355 = vld [vmem:[%s351 + $0x18] sm:$0xff]
    %v356 = vld [vmem:[%s351 + $0x20] sm:$0xff]
    %v357 = vld [vmem:[%s351 + $0x28] sm:$0xff]
    %v358 = vld [vmem:[%s351 + $0x30] sm:$0xff]
    %v359 = vld [vmem:[%s351 + $0x38] sm:$0xff]
    %v360 = vld [vmem:[%s351 + $0x40] sm:$0xff]
    %v361 = vld [vmem:[%s351 + $0x48] sm:$0xff]
    %v362 = vld [vmem:[%s351 + $0x50] sm:$0xff]
    %v363 = vld [vmem:[%s351 + $0x58] sm:$0xff]
    %v364 = vld [vmem:[%s351 + $0x60] sm:$0xff]
    %v365 = vld [vmem:[%s351 + $0x68] sm:$0xff]
    %v366 = vld [vmem:[%s351 + $0x70] sm:$0xff]
    %v367 = vld [vmem:[%s351 + $0x78] sm:$0xff]
    %368 = vmatprep.subr.mxu0 0.0
    %369 = vmatpush1.msra.mxu0 %v367
    %370 = vmatprep.subr.mxu0 0.0
    %371 = vmatpush1.msra.mxu0 %v366
    %372 = vmatprep.subr.mxu0 0.0
    %373 = vmatpush1.msra.mxu0 %v365
    %374 = vmatprep.subr.mxu0 0.0
    %375 = vmatpush1.msra.mxu0 %v364
    %376 = vmatprep.subr.mxu0 0.0
    %377 = vmatpush1.msra.mxu0 %v363
    %378 = vmatprep.subr.mxu0 0.0
    %379 = vmatpush1.msra.mxu0 %v362
    %380 = vmatprep.subr.mxu0 0.0
    %381 = vmatpush1.msra.mxu0 %v361
    %382 = vmatprep.subr.mxu0 0.0
    %383 = vmatpush1.msra.mxu0 %v360
    %384 = vmatprep.subr.mxu0 0.0
    %385 = vmatpush1.msra.mxu0 %v359
    %386 = vmatprep.subr.mxu0 0.0
    %387 = vmatpush1.msra.mxu0 %v358
    %388 = vmatprep.subr.mxu0 0.0
    %389 = vmatpush1.msra.mxu0 %v357
    %390 = vmatprep.subr.mxu0 0.0
    %391 = vmatpush1.msra.mxu0 %v356
    %392 = vmatprep.subr.mxu0 0.0
    %393 = vmatpush1.msra.mxu0 %v355
    %394 = vmatprep.subr.mxu0 0.0
    %395 = vmatpush1.msra.mxu0 %v354
    %396 = vmatprep.subr.mxu0 0.0
    %397 = vmatpush1.msra.mxu0 %v353
    %398 = vmatprep.subr.mxu0 0.0
    %399 = vmatpush1.msra.mxu0 %v352
    %400 = vmatprep.subr.mxu0 0.0
    %401 = vmatpush2.msra.mxu0 0.0
    %402 = vmatprep.subr.mxu0 0.0
    %403 = vmatpush2.msra.mxu0 0.0
    %404 = vmatprep.subr.mxu0 0.0
    %405 = vmatpush2.msra.mxu0 0.0
    %406 = vmatprep.subr.mxu0 0.0
    %407 = vmatpush2.msra.mxu0 0.0
    %408 = vmatprep.subr.mxu0 0.0
    %409 = vmatpush2.msra.mxu0 0.0
    %410 = vmatprep.subr.mxu0 0.0
    %411 = vmatpush2.msra.mxu0 0.0
    %412 = vmatprep.subr.mxu0 0.0
    %413 = vmatpush2.msra.mxu0 0.0
    %414 = vmatprep.subr.mxu0 0.0
    %415 = vmatpush2.msra.mxu0 0.0
    %416 = vmatprep.subr.mxu0 0.0
    %417 = vmatpush2.msra.mxu0 0.0
    %418 = vmatprep.subr.mxu0 0.0
    %419 = vmatpush2.msra.mxu0 0.0
    %420 = vmatprep.subr.mxu0 0.0
    %421 = vmatpush2.msra.mxu0 0.0
    %422 = vmatprep.subr.mxu0 0.0
    %423 = vmatpush2.msra.mxu0 0.0
    %424 = vmatprep.subr.mxu0 0.0
    %425 = vmatpush2.msra.mxu0 0.0
    %426 = vmatprep.subr.mxu0 0.0
    %427 = vmatpush2.msra.mxu0 0.0
    %428 = vmatprep.subr.mxu0 0.0
    %429 = vmatpush2.msra.mxu0 0.0
    %430 = vmatprep.subr.mxu0 0.0
    %431 = vmatpush2.msra.mxu0 0.0
    %432 = vmatprep.mubr.f32.mxu0 0.0
    %433 = vmatmul.mubr.f32.gmra.mxu0 %v77
    %v434 = vpop.f32.mrf.mxu0
    %v435 = vadd.f32 0.0, %v434
    %v436 = vpop.f32.mrf.mxu0
    %437 = vdwg.mxu0
    %v438 = vadd.f32 %v350, %v435
    %439 = vst [vmem:[%s349] sm:$0xff] %v438
    // Predicated region
    $region26: #{lstm_cell.1} parent=1 // pred_check
      %p440 = pneg %p35
    $region27: #{lstm_cell.1} parent=1 // pred_check_branch
      %442 = sbr.rel (%p440) target = $region29
    $region28: #{lstm_cell.1} parent=1 // pred_region
      %v443 = vld [vmem:[#allocation2] sm:$0xff]
      %v444 = vxor.u32 %v443, 2147483648
      %v445 = vmul.f32 %v444, 1.442695
      %v446 = vpow.pop %v445
      %v447 = vadd.f32 %v446, 1.0
      %v448 = vrcp.pop %v447
      %v449 = vmul.f32 1.0, %v448
      %v450 = vld [vmem:[%s167] sm:$0xff]
      %v451 = vxor.u32 %v450, 2147483648
      %v452 = vmul.f32 %v451, 1.442695
      %v453 = vpow.pop %v452
      %v454 = vadd.f32 %v453, 1.0
      %v455 = vrcp.pop %v454
      %v456 = vmul.f32 1.0, %v455
      %v457 = vld [vmem:[%s258] sm:$0xff]
      %v458 = vxor.u32 %v457, 2147483648
      %v459 = vmul.f32 %v458, 1.442695
      %v460 = vpow.pop %v459
      %v461 = vadd.f32 %v460, 1.0
      %v462 = vrcp.pop %v461
      %v463 = vmul.f32 1.0, %v462
      %v464 = vld [vmem:[%s349] sm:$0xff]
      %v465 = vtanh.pop %v464
      %v466 = vld [vmem:[%s3] sm:$0xff]
      %v467 = vmul.f32 %v456, %v466
      %v468 = vmul.f32 %v449, %v465
      %v469 = vadd.f32 %v467, %v468
      %v470 = vtanh.pop %v469
      %v471 = vmul.f32 %v463, %v470
      %472 = vst [vmem:[#allocation7] sm:$0xff] %v469
      %473 = vst [vmem:[#allocation6] sm:$0xff] %v471
    $region29: #{lstm_cell.1} parent=1 // pred_fallthru
      _
    // Predicated region
    $region30: #{lstm_cell.1} parent=1 // pred_check
      _
    $region31: #{lstm_cell.1} parent=1 // pred_check_branch
      %475 = sbr.rel (0) target = $region33
    $region32: #{lstm_cell.1} parent=1 // pred_region
      %s477 = ssub.s32 128, 128
      %478 = vsyncadd [#allocation5], %s477
      %s480 = sshll.u32 [#allocation6], 4
      %s481 = int_to_ptr.vmem [resolvable:$true] %s480
      %483 = dma.vmem_to_hbm [thread:$0]  %s481, 128, %s4, [#allocation5]
    $region33: #{lstm_cell.1} parent=1 // pred_fallthru
      _
    // Predicated region
    $region34: #{lstm_cell.1} parent=1 // pred_check
      _
    $region35: #{lstm_cell.1} parent=1 // pred_check_branch
      %485 = sbr.rel (0) target = $region37
    $region36: #{lstm_cell.1} parent=1 // pred_region
      %s487 = ssub.s32 128, 128
      %488 = vsyncadd [#allocation8], %s487
      %s490 = sshll.u32 [#allocation7], 4
      %s491 = int_to_ptr.vmem [resolvable:$true] %s490
      %493 = dma.vmem_to_hbm [thread:$0]  %s491, 128, %s5, [#allocation8]
    $region37: #{lstm_cell.1} parent=1 // pred_fallthru
      _
    // Predicated region
    $region38: #{lstm_cell.1} parent=1 // pred_check
      _
    $region39: #{lstm_cell.1} parent=1 // pred_check_branch
      %495 = sbr.rel (0) target = $region41
    $region40: #{lstm_cell.1} parent=1 // pred_region
      %496 = dma.done [#allocation5], 128
    $region41: #{lstm_cell.1} parent=1 // pred_fallthru
      _
    // Predicated region
    $region42: #{lstm_cell.1} parent=1 // pred_check
      _
    $region43: #{lstm_cell.1} parent=1 // pred_check_branch
      %498 = sbr.rel (0) target = $region45
    $region44: #{lstm_cell.1} parent=1 // pred_region
      %499 = dma.done [#allocation8], 128
    $region45: #{lstm_cell.1} parent=1 // pred_fallthru
      _
    %500 = vsyncpa [#allocation4], 1
    %501 = vsyncpa [#allocation5], 1
    %502 = vsyncpa [#allocation8], 1

</llo_original>
